<compile_context>
chip_gen: v6e
topology: v6e:2x2x1
jax: 0.10.0
libtpu: 0.0.40
codegen_flags: <defaults>
</compile_context>

<pallas_src>
import functools
import math

import jax
import jax.numpy as jnp
from jax.experimental import pallas as pl
from jax.experimental.pallas import tpu as pltpu

_LANE = 128       # feature dims padded to multiples of the 128-lane axis
_MAX_TB = 1024    # hard cap on the batch tile


def _round_up(x, m):
    return (x + m - 1) // m * m


def _sublane_quantum(dtype):
    """Second-minor tiling quantum: 8 for f32, 16 for bf16, 32 for int8/fp8."""
    itemsize = jnp.dtype(dtype).itemsize
    return 8 * max(1, 4 // itemsize)


def _vmem_budget_bytes():
    """Usable VMEM per TensorCore, leaving headroom for Mosaic internal scratch."""
    try:
        cap = int(pltpu.get_tpu_info().vmem_capacity_bytes)
    except Exception:
        cap = 64 << 20  # conservative default: v7x per-TC VMEM
    return max(16 << 20, int(cap * 0.85))   # ~54 MiB on v7x, ~109 MiB on v5e/v6e


# Hidden activations of the PyTorch module (elementwise -> VPU/EUP friendly).
# TODO(synk): 'PReLU' has a learnable parameter and is not wired into the kernel.
_ACTIVATIONS = {
    "ReLU": lambda v: jnp.maximum(v, 0.0),
    "LeakyReLU": lambda v: jnp.where(v >= 0.0, v, 0.01 * v),
    "Tanh": jnp.tanh,
    "Sigmoid": jax.nn.sigmoid,
    "Softplus": jax.nn.softplus,
    "LogSigmoid": jax.nn.log_sigmoid,
}


def _mlp_kernel(num_linear, act_fn, *refs):
    """refs = (x_ref, w0, b0, ..., w_{L-1}, b_{L-1}, out_ref).

    Runs one batch tile of the whole forward pass: each matmul accumulates in f32 on the
    MXU (activations fed in the weight dtype, so bf16 params run MXU-native), bias add and
    the hidden activation run in f32 on the VPU; the final Linear has no activation.
    """
    x_ref = refs[0]
    out_ref = refs[-1]
    y = x_ref[...]
    for i in range(num_linear):
        w = refs[1 + 2 * i][...]
        b = refs[2 + 2 * i][...]
        acc = jnp.dot(y.astype(w.dtype), w, preferred_element_type=jnp.float32)
        acc = acc + b.astype(jnp.float32)
        if i < num_linear - 1:
            acc = act_fn(acc)
        y = acc
    out_ref[...] = y.astype(out_ref.dtype)


def pad_params(params, input_dim):
    """Pad weights/biases to 128-lane multiples ONCE (call at init, not per forward).

    params: list of (W, b) with W: [in_dim, out_dim], b: [1, out_dim] (or [out_dim]).
    """
    dims = [input_dim] + [w.shape[1] for (w, _) in params]
    dims_p = [_round_up(d, _LANE) for d in dims]
    padded = []
    for i, (w, b) in enumerate(params):
        k, n = w.shape
        kp, np_ = dims_p[i], dims_p[i + 1]
        w_p = jnp.zeros((kp, np_), w.dtype).at[:k, :n].set(w)
        b_p = jnp.zeros((1, np_), b.dtype).at[:, :n].set(b.reshape(1, n))
        padded.append((w_p, b_p))
    return {"padded": padded, "dims": dims, "dims_p": dims_p,
            "input_dim": input_dim, "output_dim": dims[-1]}


def _xla_forward(x, prepared, hidden_activation):
    """Fused XLA dot chain: used for tiny shapes or weights too large for resident VMEM."""
    act = _ACTIVATIONS[hidden_activation]
    padded, dims = prepared["padded"], prepared["dims"]
    y = x.astype(jnp.float32)
    for i, (w, b) in enumerate(padded):
        k, n = dims[i], dims[i + 1]
        y = jnp.dot(y, w[:k, :n].astype(jnp.float32),
                    precision=jax.lax.Precision.HIGHEST) + b[0, :n].astype(jnp.float32)
        if i < len(padded) - 1:
            y = act(y)
    return y.astype(x.dtype)


def fnn_with_linear_forward(x, prepared, *, hidden_activation="ReLU",
                            use_pallas=None, interpret=False):
    """FNNwithLinear forward pass.

    x:        [batch, input_dim]
    prepared: output of pad_params (padded weights/biases + dims), built once.
    """
    if hidden_activation not in _ACTIVATIONS:
        raise ValueError(f"Activation type: {hidden_activation} not recognized")
    act_fn = _ACTIVATIONS[hidden_activation]

    padded = prepared["padded"]
    dims, dims_p = prepared["dims"], prepared["dims_p"]
    num_linear = len(padded)
    batch, input_dim = x.shape
    assert input_dim == prepared["input_dim"]
    output_dim = prepared["output_dim"]

    # ---- VMEM accounting (actual dtypes, block shapes, buffer counts) -------
    budget = _vmem_budget_bytes()
    weight_bytes = sum(int(w.size) * w.dtype.itemsize + int(b.size) * b.dtype.itemsize
                       for (w, b) in padded)                 # single-buffered
    x_itemsize = jnp.dtype(x.dtype).itemsize
    max_dim = max(dims_p)
    io_buffers = 3 if weight_bytes < (4 << 20) else 2        # hide x/out DMA when compute/step is tiny
    per_row_bytes = (io_buffers * dims_p[0] * x_itemsize      # x tile buffers
                     + io_buffers * dims_p[-1] * x_itemsize   # out tile buffers
                     + 3 * max_dim * 4)                       # live f32 layer temporaries
    sublane = _sublane_quantum(x.dtype)
    avail = budget - weight_bytes - (2 << 20)                 # fixed slack
    weights_fit = avail >= per_row_bytes * sublane

    if use_pallas is None:
        # Tiny models (everything padded up from small dims) are better served by XLA.
        use_pallas = weights_fit and batch >= 4 * sublane and max(dims) >= _LANE
    if not weights_fit or not use_pallas:
        # TODO(synk): add an N/K-tiled Pallas path for layers too wide to keep VMEM-resident
        # (e.g. 4096x4096 f32 on v7x); for now fall back to XLA's fused dot chain.
        return _xla_forward(x, prepared, hidden_activation)

    # ---- batch tile from the VMEM budget ------------------------------------
    tb_budget = max(sublane, (avail // per_row_bytes) // sublane * sublane)
    batch_r = _round_up(batch, sublane)
    if batch_r <= tb_budget:
        # Whole batch fits in one tile; split in two when each half is still substantial
        # so v7x's second TensorCore gets work on the "parallel" grid axis.
        tb = batch_r if batch_r < 2 * 256 else _round_up(-(-batch_r // 2), sublane)
    else:
        tb = min(tb_budget, _MAX_TB)
    tb = min(tb, batch_r)
    batch_p = _round_up(batch, tb)

    # ---- pad x only (params were pre-padded outside the hot path) -----------
    if batch_p != batch or dims_p[0] != input_dim:
        x_p = jnp.zeros((batch_p, dims_p[0]), x.dtype).at[:batch, :input_dim].set(x)
    else:
        x_p = x

    flat_args = [x_p]
    for (w_p, b_p) in padded:
        flat_args.extend([w_p, b_p])

    flops = 2 * batch_p * sum(dims_p[i] * dims_p[i + 1] for i in range(num_linear))
    transcendentals = (0 if hidden_activation in ("ReLU", "LeakyReLU")
                       else batch_p * sum(dims_p[1:-1]))
    bytes_accessed = (int(x_p.size) * x_itemsize + weight_bytes
                      + batch_p * dims_p[-1] * x_itemsize)

    def build(buffer_hints):
        def bs(shape, imap, nbuf):
            if buffer_hints:
                return pl.BlockSpec(shape, imap, pipeline_mode=pl.Buffered(nbuf))
            return pl.BlockSpec(shape, imap)

        in_specs = [bs((tb, dims_p[0]), lambda i: (i, 0), io_buffers)]
        for li in range(num_linear):
            kp, np_ = dims_p[li], dims_p[li + 1]
            # Constant index_map -> weights/biases stay VMEM-resident; single buffer.
            in_specs.append(bs((kp, np_), lambda i: (0, 0), 1))
            in_specs.append(bs((1, np_), lambda i: (0, 0), 1))
        out_spec = bs((tb, dims_p[-1]), lambda i: (i, 0), io_buffers)

        return pl.pallas_call(
            functools.partial(_mlp_kernel, num_linear, act_fn),
            out_shape=jax.ShapeDtypeStruct((batch_p, dims_p[-1]), x.dtype),
            grid=(batch_p // tb,),
            in_specs=in_specs,
            out_specs=out_spec,
            compiler_params=pltpu.CompilerParams(
                dimension_semantics=("parallel",),      # batch tiles are independent
                vmem_limit_bytes=int(budget),
            ),
            cost_estimate=pl.CostEstimate(
                flops=flops, transcendentals=transcendentals,
                bytes_accessed=bytes_accessed),
            interpret=interpret,
        )

    try:
        out_p = build(True)(*flat_args)
    except Exception:
        # Buffer-count hints not supported on this jax build: retry with default pipelining.
        out_p = build(False)(*flat_args)

    return out_p[:batch, :output_dim]


def init_params(key, input_dim, output_dim, hidden_dim, num_hidden_layers,
                dtype=jnp.float32):
    """torch.nn.Linear-style init: U(-1/sqrt(fan_in), 1/sqrt(fan_in)); W as [in_dim, out_dim]."""
    dims = [input_dim] + [hidden_dim] * (num_hidden_layers + 1) + [output_dim]
    params = []
    for i in range(len(dims) - 1):
        fan_in, fan_out = dims[i], dims[i + 1]
        key, kw, kb = jax.random.split(key, 3)
        bound = 1.0 / math.sqrt(fan_in)
        w = jax.random.uniform(kw, (fan_in, fan_out), dtype, -bound, bound)
        b = jax.random.uniform(kb, (1, fan_out), dtype, -bound, bound)
        params.append((w, b))
    return params


def reference_forward(x, params, hidden_activation="ReLU"):
    act = _ACTIVATIONS[hidden_activation]
    y = x.astype(jnp.float32)
    for i, (w, b) in enumerate(params):
        y = jnp.dot(y, w.astype(jnp.float32),
                    precision=jax.lax.Precision.HIGHEST) + b.astype(jnp.float32)
        if i < len(params) - 1:
            y = act(y)
    return y.astype(x.dtype)


if __name__ == "__main__":
    # Small shapes consistent with the module defaults:
    # FNNwithLinear(input_dim=16, output_dim=4, hidden_dim=32, num_hidden_layers=2,
    #               hidden_activation='ReLU'); batch=8.
    input_dim, output_dim, hidden_dim, num_hidden_layers = 16, 4, 32, 2
    batch = 8

    key = jax.random.PRNGKey(0)
    key, kx = jax.random.split(key)
    x = jax.random.normal(kx, (batch, input_dim), jnp.float32)

    # f32 params: Pallas path (forced; at these tiny shapes the auto-dispatch would pick XLA).
    params = init_params(key, input_dim, output_dim, hidden_dim, num_hidden_layers,
                         dtype=jnp.float32)
    prepared = pad_params(params, input_dim)          # pad once, outside the hot path
    out = fnn_with_linear_forward(x, prepared, use_pallas=True)
    out = jax.block_until_ready(out)
    ref = reference_forward(x, params)
    assert out.shape == (batch, output_dim)
    assert jnp.allclose(out, ref, atol=1e-3, rtol=1e-3), "f32 mismatch vs reference"

    # bf16 params: MXU-native path; intermediate activations round to bf16, so looser tolerance.
    params_bf16 = [(w.astype(jnp.bfloat16), b.astype(jnp.bfloat16)) for (w, b) in params]
    prepared_bf16 = pad_params(params_bf16, input_dim)
    out_bf16 = jax.block_until_ready(
        fnn_with_linear_forward(x, prepared_bf16, use_pallas=True))
    assert out_bf16.shape == (batch, output_dim)
    assert jnp.allclose(out_bf16, ref, atol=1e-1, rtol=1e-1), "bf16 mismatch vs reference"

    print("KERNEL_OK")
</pallas_src>

<mosaic_0001>
module attributes {stable_mosaic.version = 11 : i64} {
  func.func @_mlp_kernel(%arg0: i32, %arg1: memref<8x128xf32, #tpu.memory_space<vmem>>, %arg2: memref<128x128xf32, #tpu.memory_space<vmem>>, %arg3: memref<1x128xf32, #tpu.memory_space<vmem>>, %arg4: memref<128x128xf32, #tpu.memory_space<vmem>>, %arg5: memref<1x128xf32, #tpu.memory_space<vmem>>, %arg6: memref<128x128xf32, #tpu.memory_space<vmem>>, %arg7: memref<1x128xf32, #tpu.memory_space<vmem>>, %arg8: memref<128x128xf32, #tpu.memory_space<vmem>>, %arg9: memref<1x128xf32, #tpu.memory_space<vmem>>, %arg10: memref<8x128xf32, #tpu.memory_space<vmem>>) attributes {dimension_semantics = [#tpu.dimension_semantics<parallel>], iteration_bounds = array<i64: 1>, scalar_prefetch = 0 : i64, scratch_operands = 0 : i64, tpu.core_type = #tpu.core_type<tc>, window_params = [{transform_indices = @transform_0, window_bounds = array<i64: 8, 128>}, {pipeline_mode = #tpu.pipeline_mode<synchronous>, transform_indices = @transform_1, window_bounds = array<i64: 128, 128>}, {pipeline_mode = #tpu.pipeline_mode<synchronous>, transform_indices = @transform_2, window_bounds = array<i64: 1, 128>}, {pipeline_mode = #tpu.pipeline_mode<synchronous>, transform_indices = @transform_3, window_bounds = array<i64: 128, 128>}, {pipeline_mode = #tpu.pipeline_mode<synchronous>, transform_indices = @transform_4, window_bounds = array<i64: 1, 128>}, {pipeline_mode = #tpu.pipeline_mode<synchronous>, transform_indices = @transform_5, window_bounds = array<i64: 128, 128>}, {pipeline_mode = #tpu.pipeline_mode<synchronous>, transform_indices = @transform_6, window_bounds = array<i64: 1, 128>}, {pipeline_mode = #tpu.pipeline_mode<synchronous>, transform_indices = @transform_7, window_bounds = array<i64: 128, 128>}, {pipeline_mode = #tpu.pipeline_mode<synchronous>, transform_indices = @transform_8, window_bounds = array<i64: 1, 128>}, {transform_indices = @transform_9, window_bounds = array<i64: 8, 128>}]} {
    %c0 = arith.constant 0 : index
    %c0_0 = arith.constant 0 : index
    %0 = vector.load %arg1[%c0, %c0_0] : memref<8x128xf32, #tpu.memory_space<vmem>>, vector<8x128xf32>
    %c0_1 = arith.constant 0 : index
    %c0_2 = arith.constant 0 : index
    %1 = vector.load %arg2[%c0_1, %c0_2] : memref<128x128xf32, #tpu.memory_space<vmem>>, vector<128x128xf32>
    %c0_3 = arith.constant 0 : index
    %c0_4 = arith.constant 0 : index
    %2 = vector.load %arg3[%c0_3, %c0_4] : memref<1x128xf32, #tpu.memory_space<vmem>>, vector<1x128xf32>
    %cst = arith.constant dense<0.000000e+00> : vector<8x128xf32>
    %3 = tpu.matmul %0, %1, %cst {dimension_numbers = #tpu.dot_dimension_numbers<[1], [0], [0], [1], [0, 0, 1, 1], [], []>} : vector<8x128xf32>, vector<128x128xf32>, vector<8x128xf32> -> vector<8x128xf32>
    %4 = vector.broadcast %2 : vector<1x128xf32> to vector<8x128xf32>
    %5 = arith.addf %3, %4 : vector<8x128xf32>
    %cst_5 = arith.constant 0.000000e+00 : f32
    %6 = vector.broadcast %cst_5 : f32 to vector<8x128xf32>
    %7 = arith.maximumf %5, %6 : vector<8x128xf32>
    %c0_6 = arith.constant 0 : index
    %c0_7 = arith.constant 0 : index
    %8 = vector.load %arg4[%c0_6, %c0_7] : memref<128x128xf32, #tpu.memory_space<vmem>>, vector<128x128xf32>
    %c0_8 = arith.constant 0 : index
    %c0_9 = arith.constant 0 : index
    %9 = vector.load %arg5[%c0_8, %c0_9] : memref<1x128xf32, #tpu.memory_space<vmem>>, vector<1x128xf32>
    %cst_10 = arith.constant dense<0.000000e+00> : vector<8x128xf32>
    %10 = tpu.matmul %7, %8, %cst_10 {dimension_numbers = #tpu.dot_dimension_numbers<[1], [0], [0], [1], [0, 0, 1, 1], [], []>} : vector<8x128xf32>, vector<128x128xf32>, vector<8x128xf32> -> vector<8x128xf32>
    %11 = vector.broadcast %9 : vector<1x128xf32> to vector<8x128xf32>
    %12 = arith.addf %10, %11 : vector<8x128xf32>
    %cst_11 = arith.constant 0.000000e+00 : f32
    %13 = vector.broadcast %cst_11 : f32 to vector<8x128xf32>
    %14 = arith.maximumf %12, %13 : vector<8x128xf32>
    %c0_12 = arith.constant 0 : index
    %c0_13 = arith.constant 0 : index
    %15 = vector.load %arg6[%c0_12, %c0_13] : memref<128x128xf32, #tpu.memory_space<vmem>>, vector<128x128xf32>
    %c0_14 = arith.constant 0 : index
    %c0_15 = arith.constant 0 : index
    %16 = vector.load %arg7[%c0_14, %c0_15] : memref<1x128xf32, #tpu.memory_space<vmem>>, vector<1x128xf32>
    %cst_16 = arith.constant dense<0.000000e+00> : vector<8x128xf32>
    %17 = tpu.matmul %14, %15, %cst_16 {dimension_numbers = #tpu.dot_dimension_numbers<[1], [0], [0], [1], [0, 0, 1, 1], [], []>} : vector<8x128xf32>, vector<128x128xf32>, vector<8x128xf32> -> vector<8x128xf32>
    %18 = vector.broadcast %16 : vector<1x128xf32> to vector<8x128xf32>
    %19 = arith.addf %17, %18 : vector<8x128xf32>
    %cst_17 = arith.constant 0.000000e+00 : f32
    %20 = vector.broadcast %cst_17 : f32 to vector<8x128xf32>
    %21 = arith.maximumf %19, %20 : vector<8x128xf32>
    %c0_18 = arith.constant 0 : index
    %c0_19 = arith.constant 0 : index
    %22 = vector.load %arg8[%c0_18, %c0_19] : memref<128x128xf32, #tpu.memory_space<vmem>>, vector<128x128xf32>
    %c0_20 = arith.constant 0 : index
    %c0_21 = arith.constant 0 : index
    %23 = vector.load %arg9[%c0_20, %c0_21] : memref<1x128xf32, #tpu.memory_space<vmem>>, vector<1x128xf32>
    %cst_22 = arith.constant dense<0.000000e+00> : vector<8x128xf32>
    %24 = tpu.matmul %21, %22, %cst_22 {dimension_numbers = #tpu.dot_dimension_numbers<[1], [0], [0], [1], [0, 0, 1, 1], [], []>} : vector<8x128xf32>, vector<128x128xf32>, vector<8x128xf32> -> vector<8x128xf32>
    %25 = vector.broadcast %23 : vector<1x128xf32> to vector<8x128xf32>
    %26 = arith.addf %24, %25 : vector<8x128xf32>
    %c0_23 = arith.constant 0 : index
    %c0_24 = arith.constant 0 : index
    %27 = vector.load %arg10[%c0_23, %c0_24] : memref<8x128xf32, #tpu.memory_space<vmem>>, vector<8x128xf32>
    tpu.vector_store %arg10[%c0_23, %c0_24], %26 {strides = array<i32>} : memref<8x128xf32, #tpu.memory_space<vmem>>, vector<8x128xf32>,
    return
  }
  func.func @transform_0(%arg0: i32) -> (i32, i32) {
    %c0_i32 = arith.constant 0 : i32
    %c0_i32_0 = arith.constant 0 : i32
    return %arg0, %c0_i32 : i32, i32
  }
  func.func @transform_1(%arg0: i32) -> (i32, i32) {
    %c0_i32 = arith.constant 0 : i32
    %c0_i32_0 = arith.constant 0 : i32
    %c0_i32_1 = arith.constant 0 : i32
    return %c0_i32, %c0_i32_0 : i32, i32
  }
  func.func @transform_2(%arg0: i32) -> (i32, i32) {
    %c0_i32 = arith.constant 0 : i32
    %c0_i32_0 = arith.constant 0 : i32
    %c0_i32_1 = arith.constant 0 : i32
    return %c0_i32, %c0_i32_0 : i32, i32
  }
  func.func @transform_3(%arg0: i32) -> (i32, i32) {
    %c0_i32 = arith.constant 0 : i32
    %c0_i32_0 = arith.constant 0 : i32
    %c0_i32_1 = arith.constant 0 : i32
    return %c0_i32, %c0_i32_0 : i32, i32
  }
  func.func @transform_4(%arg0: i32) -> (i32, i32) {
    %c0_i32 = arith.constant 0 : i32
    %c0_i32_0 = arith.constant 0 : i32
    %c0_i32_1 = arith.constant 0 : i32
    return %c0_i32, %c0_i32_0 : i32, i32
  }
  func.func @transform_5(%arg0: i32) -> (i32, i32) {
    %c0_i32 = arith.constant 0 : i32
    %c0_i32_0 = arith.constant 0 : i32
    %c0_i32_1 = arith.constant 0 : i32
    return %c0_i32, %c0_i32_0 : i32, i32
  }
  func.func @transform_6(%arg0: i32) -> (i32, i32) {
    %c0_i32 = arith.constant 0 : i32
    %c0_i32_0 = arith.constant 0 : i32
    %c0_i32_1 = arith.constant 0 : i32
    return %c0_i32, %c0_i32_0 : i32, i32
  }
  func.func @transform_7(%arg0: i32) -> (i32, i32) {
    %c0_i32 = arith.constant 0 : i32
    %c0_i32_0 = arith.constant 0 : i32
    %c0_i32_1 = arith.constant 0 : i32
    return %c0_i32, %c0_i32_0 : i32, i32
  }
  func.func @transform_8(%arg0: i32) -> (i32, i32) {
    %c0_i32 = arith.constant 0 : i32
    %c0_i32_0 = arith.constant 0 : i32
    %c0_i32_1 = arith.constant 0 : i32
    return %c0_i32, %c0_i32_0 : i32, i32
  }
  func.func @transform_9(%arg0: i32) -> (i32, i32) {
    %c0_i32 = arith.constant 0 : i32
    %c0_i32_0 = arith.constant 0 : i32
    return %arg0, %c0_i32 : i32, i32
  }
}

</mosaic_0001>

<llo_original>
// kernel: tpu_custom_call.1
$region0: #{tpu_custom_call.1}
  #allocation0 [shape = 'u32[]', space=smem, size = 0x4, offset = 0x4, fixed_abs, tag = 'smem constant byte address 0x4 - core index']
  #allocation1 [shape = 'u32[144,128]{1,0:T(1,128)}', space=vmem, size = 0x12000, scoped, tag = 'internal scratch']
  %s0 = inlined_call_operand.hbm [shape: f32[8,128], index: 0, kind: input, shape index: {}]
  %s1 = inlined_call_operand.hbm [shape: f32[128,128], index: 1, kind: input, shape index: {}]
  %s2 = inlined_call_operand.vmem [shape: f32[1,128], index: 2, kind: input, shape index: {}]
  %s3 = inlined_call_operand.hbm [shape: f32[128,128], index: 3, kind: input, shape index: {}]
  %s4 = inlined_call_operand.vmem [shape: f32[1,128], index: 4, kind: input, shape index: {}]
  %s5 = inlined_call_operand.hbm [shape: f32[128,128], index: 5, kind: input, shape index: {}]
  %s6 = inlined_call_operand.vmem [shape: f32[1,128], index: 6, kind: input, shape index: {}]
  %s7 = inlined_call_operand.hbm [shape: f32[128,128], index: 7, kind: input, shape index: {}]
  %s8 = inlined_call_operand.vmem [shape: f32[1,128], index: 8, kind: input, shape index: {}]
  %s9 = inlined_call_operand.hbm [shape: f32[8,128], index: 9, kind: output, shape index: {}]
  %s10 = sld [smem:[#allocation0]]
  $region66: #{tpu_custom_call.1} parent=0
    _
  %s12 = ssub.s32 1, %s10
  %s13 = scalar_select 0, %s12, %s10
  $region1: #{tpu_custom_call.1} parent=0
    #allocation2 [shape = 'u8[4096]{0}', space=vmem, size = 0x1000, scoped, tag = 'input window, operand 0, single buffered']
    #allocation3 [shape = 's32[1]{0}', space=sflag, size = 0x4, scoped, tag = 'scoped memory for tpu_custom_call.1']
    #allocation4 [shape = 's32[1]{0}', space=sflag, size = 0x4, scoped, tag = 'scoped memory for tpu_custom_call.1']
    #allocation5 [shape = 'u8[65536]{0}', space=vmem, size = 0x10000, scoped, tag = 'input window, operand 1, single buffered']
    #allocation6 [shape = 's32[1]{0}', space=sflag, size = 0x4, scoped, tag = 'scoped memory for tpu_custom_call.1']
    #allocation7 [shape = 'u8[65536]{0}', space=vmem, size = 0x10000, scoped, tag = 'input window, operand 3, single buffered']
    #allocation8 [shape = 'u8[65536]{0}', space=vmem, size = 0x10000, scoped, tag = 'input window, operand 5, single buffered']
    #allocation9 [shape = 's32[1]{0}', space=sflag, size = 0x4, scoped, tag = 'scoped memory for tpu_custom_call.1']
    #allocation10 [shape = 'u8[65536]{0}', space=vmem, size = 0x10000, scoped, tag = 'input window, operand 7, single buffered']
    #allocation11 [shape = 'u8[4096]{0}', space=vmem, size = 0x1000, scoped, tag = 'output window, operand 0, single buffered']
    %14 = vsyncpa [#allocation3], 0
    %15 = vsyncpa [#allocation6], 0
    %16 = vsyncpa [#allocation9], 0
    %17 = vsyncpa [#allocation4], 0
    // Predicated region
    $region2: #{tpu_custom_call.1} parent=1 // pred_check
      _
    $region3: #{tpu_custom_call.1} parent=1 // pred_check_branch
      %19 = sbr.rel (0) target = $region5
    $region4: #{tpu_custom_call.1} parent=1 // pred_region
      %s21 = ssub.s32 128, 128
      %22 = vsyncadd [#allocation3], %s21
      %s24 = sshll.u32 [#allocation2], 4
      %s25 = int_to_ptr.vmem [resolvable:$true] %s24
      %27 = dma.hbm_to_vmem [thread:$0]  %s0, 128, %s25, [#allocation3]
    $region5: #{tpu_custom_call.1} parent=1 // pred_fallthru
      _
    // Predicated region
    $region6: #{tpu_custom_call.1} parent=1 // pred_check
      _
    $region7: #{tpu_custom_call.1} parent=1 // pred_check_branch
      %29 = sbr.rel (0) target = $region9
    $region8: #{tpu_custom_call.1} parent=1 // pred_region
      %s31 = ssub.s32 2048, 2048
      %32 = vsyncadd [#allocation6], %s31
      %s33 = sshll.u32 [#allocation5], 4
      %s34 = int_to_ptr.vmem [resolvable:$true] %s33
      %39 = dma.hbm_to_vmem [thread:$0]  %s1, 2048, %s34, [#allocation6], 128, 128, 8
    $region9: #{tpu_custom_call.1} parent=1 // pred_fallthru
      _
    // Predicated region
    $region10: #{tpu_custom_call.1} parent=1 // pred_check
      _
    $region11: #{tpu_custom_call.1} parent=1 // pred_check_branch
      %41 = sbr.rel (0) target = $region13
    $region12: #{tpu_custom_call.1} parent=1 // pred_region
      _
    $region13: #{tpu_custom_call.1} parent=1 // pred_fallthru
      _
    // Predicated region
    $region14: #{tpu_custom_call.1} parent=1 // pred_check
      _
    $region15: #{tpu_custom_call.1} parent=1 // pred_check_branch
      %43 = sbr.rel (0) target = $region17
    $region16: #{tpu_custom_call.1} parent=1 // pred_region
      %s45 = ssub.s32 2048, 2048
      %46 = vsyncadd [#allocation6], %s45
      %s47 = sshll.u32 [#allocation7], 4
      %s48 = int_to_ptr.vmem [resolvable:$true] %s47
      %53 = dma.hbm_to_vmem [thread:$0]  %s3, 2048, %s48, [#allocation6], 128, 128, 8
    $region17: #{tpu_custom_call.1} parent=1 // pred_fallthru
      _
    // Predicated region
    $region18: #{tpu_custom_call.1} parent=1 // pred_check
      _
    $region19: #{tpu_custom_call.1} parent=1 // pred_check_branch
      %55 = sbr.rel (0) target = $region21
    $region20: #{tpu_custom_call.1} parent=1 // pred_region
      _
    $region21: #{tpu_custom_call.1} parent=1 // pred_fallthru
      _
    // Predicated region
    $region22: #{tpu_custom_call.1} parent=1 // pred_check
      _
    $region23: #{tpu_custom_call.1} parent=1 // pred_check_branch
      %57 = sbr.rel (0) target = $region25
    $region24: #{tpu_custom_call.1} parent=1 // pred_region
      %s59 = ssub.s32 2048, 2048
      %60 = vsyncadd [#allocation9], %s59
      %s61 = sshll.u32 [#allocation8], 4
      %s62 = int_to_ptr.vmem [resolvable:$true] %s61
      %67 = dma.hbm_to_vmem [thread:$0]  %s5, 2048, %s62, [#allocation9], 128, 128, 8
    $region25: #{tpu_custom_call.1} parent=1 // pred_fallthru
      _
    // Predicated region
    $region26: #{tpu_custom_call.1} parent=1 // pred_check
      _
    $region27: #{tpu_custom_call.1} parent=1 // pred_check_branch
      %69 = sbr.rel (0) target = $region29
    $region28: #{tpu_custom_call.1} parent=1 // pred_region
      _
    $region29: #{tpu_custom_call.1} parent=1 // pred_fallthru
      _
    // Predicated region
    $region30: #{tpu_custom_call.1} parent=1 // pred_check
      _
    $region31: #{tpu_custom_call.1} parent=1 // pred_check_branch
      %71 = sbr.rel (0) target = $region33
    $region32: #{tpu_custom_call.1} parent=1 // pred_region
      %s73 = ssub.s32 2048, 2048
      %74 = vsyncadd [#allocation9], %s73
      %s75 = sshll.u32 [#allocation10], 4
      %s76 = int_to_ptr.vmem [resolvable:$true] %s75
      %81 = dma.hbm_to_vmem [thread:$0]  %s7, 2048, %s76, [#allocation9], 128, 128, 8
    $region33: #{tpu_custom_call.1} parent=1 // pred_fallthru
      _
    // Predicated region
    $region34: #{tpu_custom_call.1} parent=1 // pred_check
      _
    $region35: #{tpu_custom_call.1} parent=1 // pred_check_branch
      %83 = sbr.rel (0) target = $region37
    $region36: #{tpu_custom_call.1} parent=1 // pred_region
      _
    $region37: #{tpu_custom_call.1} parent=1 // pred_fallthru
      _
    // Predicated region
    $region38: #{tpu_custom_call.1} parent=1 // pred_check
      _
    $region39: #{tpu_custom_call.1} parent=1 // pred_check_branch
      %85 = sbr.rel (0) target = $region41
    $region40: #{tpu_custom_call.1} parent=1 // pred_region
      %86 = dma.done [#allocation3], 128
    $region41: #{tpu_custom_call.1} parent=1 // pred_fallthru
      _
    // Predicated region
    $region42: #{tpu_custom_call.1} parent=1 // pred_check
      _
    $region43: #{tpu_custom_call.1} parent=1 // pred_check_branch
      %88 = sbr.rel (0) target = $region45
    $region44: #{tpu_custom_call.1} parent=1 // pred_region
      %89 = dma.done [#allocation6], 2048
    $region45: #{tpu_custom_call.1} parent=1 // pred_fallthru
      _
    // Predicated region
    $region46: #{tpu_custom_call.1} parent=1 // pred_check
      _
    $region47: #{tpu_custom_call.1} parent=1 // pred_check_branch
      %91 = sbr.rel (0) target = $region49
    $region48: #{tpu_custom_call.1} parent=1 // pred_region
      %92 = dma.done [#allocation6], 2048
    $region49: #{tpu_custom_call.1} parent=1 // pred_fallthru
      _
    // Predicated region
    $region50: #{tpu_custom_call.1} parent=1 // pred_check
      _
    $region51: #{tpu_custom_call.1} parent=1 // pred_check_branch
      %94 = sbr.rel (0) target = $region53
    $region52: #{tpu_custom_call.1} parent=1 // pred_region
      %95 = dma.done [#allocation9], 2048
    $region53: #{tpu_custom_call.1} parent=1 // pred_fallthru
      _
    // Predicated region
    $region54: #{tpu_custom_call.1} parent=1 // pred_check
      _
    $region55: #{tpu_custom_call.1} parent=1 // pred_check_branch
      %97 = sbr.rel (0) target = $region57
    $region56: #{tpu_custom_call.1} parent=1 // pred_region
      %98 = dma.done [#allocation9], 2048
    $region57: #{tpu_custom_call.1} parent=1 // pred_fallthru
      _
    %v99 = vld [vmem:[#allocation2] sm:$0xff]
    %v100 = vld [vmem:[#allocation5] sm:$0xff]
    %v101 = vld [vmem:[#allocation5 + $0x8] sm:$0xff]
    %v102 = vld [vmem:[#allocation5 + $0x10] sm:$0xff]
    %v103 = vld [vmem:[#allocation5 + $0x18] sm:$0xff]
    %v104 = vld [vmem:[#allocation5 + $0x20] sm:$0xff]
    %v105 = vld [vmem:[#allocation5 + $0x28] sm:$0xff]
    %v106 = vld [vmem:[#allocation5 + $0x30] sm:$0xff]
    %v107 = vld [vmem:[#allocation5 + $0x38] sm:$0xff]
    %v108 = vld [vmem:[#allocation5 + $0x40] sm:$0xff]
    %v109 = vld [vmem:[#allocation5 + $0x48] sm:$0xff]
    %v110 = vld [vmem:[#allocation5 + $0x50] sm:$0xff]
    %v111 = vld [vmem:[#allocation5 + $0x58] sm:$0xff]
    %v112 = vld [vmem:[#allocation5 + $0x60] sm:$0xff]
    %v113 = vld [vmem:[#allocation5 + $0x68] sm:$0xff]
    %v114 = vld [vmem:[#allocation5 + $0x70] sm:$0xff]
    %v115 = vld [vmem:[#allocation5 + $0x78] sm:$0xff]
    %v116 = vld [vmem:[%s2] sm:$0x1]
    %v118 = vlaneseq
    %v119 = vshrl.u32 %v118, 7
    %v120 = vsub.s32 0, %v119
    %v121 = vrot.slane %v116, %v120
    %123 = vmatprep.subr.mxu0 0.0
    %124 = vmatpush1.msra.mxu0 %v115
    %125 = vmatprep.subr.mxu0 0.0
    %126 = vmatpush1.msra.mxu0 %v114
    %127 = vmatprep.subr.mxu0 0.0
    %128 = vmatpush1.msra.mxu0 %v113
    %129 = vmatprep.subr.mxu0 0.0
    %130 = vmatpush1.msra.mxu0 %v112
    %131 = vmatprep.subr.mxu0 0.0
    %132 = vmatpush1.msra.mxu0 %v111
    %133 = vmatprep.subr.mxu0 0.0
    %134 = vmatpush1.msra.mxu0 %v110
    %135 = vmatprep.subr.mxu0 0.0
    %136 = vmatpush1.msra.mxu0 %v109
    %137 = vmatprep.subr.mxu0 0.0
    %138 = vmatpush1.msra.mxu0 %v108
    %139 = vmatprep.subr.mxu0 0.0
    %140 = vmatpush1.msra.mxu0 %v107
    %141 = vmatprep.subr.mxu0 0.0
    %142 = vmatpush1.msra.mxu0 %v106
    %143 = vmatprep.subr.mxu0 0.0
    %144 = vmatpush1.msra.mxu0 %v105
    %145 = vmatprep.subr.mxu0 0.0
    %146 = vmatpush1.msra.mxu0 %v104
    %147 = vmatprep.subr.mxu0 0.0
    %148 = vmatpush1.msra.mxu0 %v103
    %149 = vmatprep.subr.mxu0 0.0
    %150 = vmatpush1.msra.mxu0 %v102
    %151 = vmatprep.subr.mxu0 0.0
    %152 = vmatpush1.msra.mxu0 %v101
    %153 = vmatprep.subr.mxu0 0.0
    %154 = vmatpush1.msra.mxu0 %v100
    %155 = vmatprep.subr.mxu0 0.0
    %156 = vmatpush2.msra.mxu0 0.0
    %157 = vmatprep.subr.mxu0 0.0
    %158 = vmatpush2.msra.mxu0 0.0
    %159 = vmatprep.subr.mxu0 0.0
    %160 = vmatpush2.msra.mxu0 0.0
    %161 = vmatprep.subr.mxu0 0.0
    %162 = vmatpush2.msra.mxu0 0.0
    %163 = vmatprep.subr.mxu0 0.0
    %164 = vmatpush2.msra.mxu0 0.0
    %165 = vmatprep.subr.mxu0 0.0
    %166 = vmatpush2.msra.mxu0 0.0
    %167 = vmatprep.subr.mxu0 0.0
    %168 = vmatpush2.msra.mxu0 0.0
    %169 = vmatprep.subr.mxu0 0.0
    %170 = vmatpush2.msra.mxu0 0.0
    %171 = vmatprep.subr.mxu0 0.0
    %172 = vmatpush2.msra.mxu0 0.0
    %173 = vmatprep.subr.mxu0 0.0
    %174 = vmatpush2.msra.mxu0 0.0
    %175 = vmatprep.subr.mxu0 0.0
    %176 = vmatpush2.msra.mxu0 0.0
    %177 = vmatprep.subr.mxu0 0.0
    %178 = vmatpush2.msra.mxu0 0.0
    %179 = vmatprep.subr.mxu0 0.0
    %180 = vmatpush2.msra.mxu0 0.0
    %181 = vmatprep.subr.mxu0 0.0
    %182 = vmatpush2.msra.mxu0 0.0
    %183 = vmatprep.subr.mxu0 0.0
    %184 = vmatpush2.msra.mxu0 0.0
    %185 = vmatprep.subr.mxu0 0.0
    %186 = vmatpush2.msra.mxu0 0.0
    %187 = vmatprep.mubr.f32.mxu0 0.0
    %188 = vmatmul.mubr.f32.gmra.mxu0 %v99
    %v189 = vpop.f32.mrf.mxu0
    %v190 = vadd.f32 %v121, %v189
    %v191 = vpop.f32.mrf.mxu0
    %192 = vdwg.mxu0
    %v193 = vmax.f32 %v190, 0.0
    %v194 = vld [vmem:[#allocation7] sm:$0xff]
    %v195 = vld [vmem:[#allocation7 + $0x8] sm:$0xff]
    %v196 = vld [vmem:[#allocation7 + $0x10] sm:$0xff]
    %v197 = vld [vmem:[#allocation7 + $0x18] sm:$0xff]
    %v198 = vld [vmem:[#allocation7 + $0x20] sm:$0xff]
    %v199 = vld [vmem:[#allocation7 + $0x28] sm:$0xff]
    %v200 = vld [vmem:[#allocation7 + $0x30] sm:$0xff]
    %v201 = vld [vmem:[#allocation7 + $0x38] sm:$0xff]
    %v202 = vld [vmem:[#allocation7 + $0x40] sm:$0xff]
    %v203 = vld [vmem:[#allocation7 + $0x48] sm:$0xff]
    %v204 = vld [vmem:[#allocation7 + $0x50] sm:$0xff]
    %v205 = vld [vmem:[#allocation7 + $0x58] sm:$0xff]
    %v206 = vld [vmem:[#allocation7 + $0x60] sm:$0xff]
    %v207 = vld [vmem:[#allocation7 + $0x68] sm:$0xff]
    %v208 = vld [vmem:[#allocation7 + $0x70] sm:$0xff]
    %v209 = vld [vmem:[#allocation7 + $0x78] sm:$0xff]
    %v210 = vld [vmem:[%s4] sm:$0x1]
    %v212 = vlaneseq
    %v213 = vshrl.u32 %v212, 7
    %v214 = vsub.s32 0, %v213
    %v215 = vrot.slane %v210, %v214
    %217 = vmatprep.subr.mxu0 0.0
    %218 = vmatpush1.msra.mxu0 %v209
    %219 = vmatprep.subr.mxu0 0.0
    %220 = vmatpush1.msra.mxu0 %v208
    %221 = vmatprep.subr.mxu0 0.0
    %222 = vmatpush1.msra.mxu0 %v207
    %223 = vmatprep.subr.mxu0 0.0
    %224 = vmatpush1.msra.mxu0 %v206
    %225 = vmatprep.subr.mxu0 0.0
    %226 = vmatpush1.msra.mxu0 %v205
    %227 = vmatprep.subr.mxu0 0.0
    %228 = vmatpush1.msra.mxu0 %v204
    %229 = vmatprep.subr.mxu0 0.0
    %230 = vmatpush1.msra.mxu0 %v203
    %231 = vmatprep.subr.mxu0 0.0
    %232 = vmatpush1.msra.mxu0 %v202
    %233 = vmatprep.subr.mxu0 0.0
    %234 = vmatpush1.msra.mxu0 %v201
    %235 = vmatprep.subr.mxu0 0.0
    %236 = vmatpush1.msra.mxu0 %v200
    %237 = vmatprep.subr.mxu0 0.0
    %238 = vmatpush1.msra.mxu0 %v199
    %239 = vmatprep.subr.mxu0 0.0
    %240 = vmatpush1.msra.mxu0 %v198
    %241 = vmatprep.subr.mxu0 0.0
    %242 = vmatpush1.msra.mxu0 %v197
    %243 = vmatprep.subr.mxu0 0.0
    %244 = vmatpush1.msra.mxu0 %v196
    %245 = vmatprep.subr.mxu0 0.0
    %246 = vmatpush1.msra.mxu0 %v195
    %247 = vmatprep.subr.mxu0 0.0
    %248 = vmatpush1.msra.mxu0 %v194
    %249 = vmatprep.subr.mxu0 0.0
    %250 = vmatpush2.msra.mxu0 0.0
    %251 = vmatprep.subr.mxu0 0.0
    %252 = vmatpush2.msra.mxu0 0.0
    %253 = vmatprep.subr.mxu0 0.0
    %254 = vmatpush2.msra.mxu0 0.0
    %255 = vmatprep.subr.mxu0 0.0
    %256 = vmatpush2.msra.mxu0 0.0
    %257 = vmatprep.subr.mxu0 0.0
    %258 = vmatpush2.msra.mxu0 0.0
    %259 = vmatprep.subr.mxu0 0.0
    %260 = vmatpush2.msra.mxu0 0.0
    %261 = vmatprep.subr.mxu0 0.0
    %262 = vmatpush2.msra.mxu0 0.0
    %263 = vmatprep.subr.mxu0 0.0
    %264 = vmatpush2.msra.mxu0 0.0
    %265 = vmatprep.subr.mxu0 0.0
    %266 = vmatpush2.msra.mxu0 0.0
    %267 = vmatprep.subr.mxu0 0.0
    %268 = vmatpush2.msra.mxu0 0.0
    %269 = vmatprep.subr.mxu0 0.0
    %270 = vmatpush2.msra.mxu0 0.0
    %271 = vmatprep.subr.mxu0 0.0
    %272 = vmatpush2.msra.mxu0 0.0
    %273 = vmatprep.subr.mxu0 0.0
    %274 = vmatpush2.msra.mxu0 0.0
    %275 = vmatprep.subr.mxu0 0.0
    %276 = vmatpush2.msra.mxu0 0.0
    %277 = vmatprep.subr.mxu0 0.0
    %278 = vmatpush2.msra.mxu0 0.0
    %279 = vmatprep.subr.mxu0 0.0
    %280 = vmatpush2.msra.mxu0 0.0
    %281 = vmatprep.mubr.f32.mxu0 0.0
    %282 = vmatmul.mubr.f32.gmra.mxu0 %v193
    %v283 = vpop.f32.mrf.mxu0
    %v284 = vadd.f32 %v215, %v283
    %v285 = vpop.f32.mrf.mxu0
    %286 = vdwg.mxu0
    %v287 = vmax.f32 %v284, 0.0
    %v288 = vld [vmem:[#allocation8] sm:$0xff]
    %v289 = vld [vmem:[#allocation8 + $0x8] sm:$0xff]
    %v290 = vld [vmem:[#allocation8 + $0x10] sm:$0xff]
    %v291 = vld [vmem:[#allocation8 + $0x18] sm:$0xff]
    %v292 = vld [vmem:[#allocation8 + $0x20] sm:$0xff]
    %v293 = vld [vmem:[#allocation8 + $0x28] sm:$0xff]
    %v294 = vld [vmem:[#allocation8 + $0x30] sm:$0xff]
    %v295 = vld [vmem:[#allocation8 + $0x38] sm:$0xff]
    %v296 = vld [vmem:[#allocation8 + $0x40] sm:$0xff]
    %v297 = vld [vmem:[#allocation8 + $0x48] sm:$0xff]
    %v298 = vld [vmem:[#allocation8 + $0x50] sm:$0xff]
    %v299 = vld [vmem:[#allocation8 + $0x58] sm:$0xff]
    %v300 = vld [vmem:[#allocation8 + $0x60] sm:$0xff]
    %v301 = vld [vmem:[#allocation8 + $0x68] sm:$0xff]
    %v302 = vld [vmem:[#allocation8 + $0x70] sm:$0xff]
    %v303 = vld [vmem:[#allocation8 + $0x78] sm:$0xff]
    %v304 = vld [vmem:[%s6] sm:$0x1]
    %v306 = vlaneseq
    %v307 = vshrl.u32 %v306, 7
    %v308 = vsub.s32 0, %v307
    %v309 = vrot.slane %v304, %v308
    %311 = vmatprep.subr.mxu0 0.0
    %312 = vmatpush1.msra.mxu0 %v303
    %313 = vmatprep.subr.mxu0 0.0
    %314 = vmatpush1.msra.mxu0 %v302
    %315 = vmatprep.subr.mxu0 0.0
    %316 = vmatpush1.msra.mxu0 %v301
    %317 = vmatprep.subr.mxu0 0.0
    %318 = vmatpush1.msra.mxu0 %v300
    %319 = vmatprep.subr.mxu0 0.0
    %320 = vmatpush1.msra.mxu0 %v299
    %321 = vmatprep.subr.mxu0 0.0
    %322 = vmatpush1.msra.mxu0 %v298
    %323 = vmatprep.subr.mxu0 0.0
    %324 = vmatpush1.msra.mxu0 %v297
    %325 = vmatprep.subr.mxu0 0.0
    %326 = vmatpush1.msra.mxu0 %v296
    %327 = vmatprep.subr.mxu0 0.0
    %328 = vmatpush1.msra.mxu0 %v295
    %329 = vmatprep.subr.mxu0 0.0
    %330 = vmatpush1.msra.mxu0 %v294
    %331 = vmatprep.subr.mxu0 0.0
    %332 = vmatpush1.msra.mxu0 %v293
    %333 = vmatprep.subr.mxu0 0.0
    %334 = vmatpush1.msra.mxu0 %v292
    %335 = vmatprep.subr.mxu0 0.0
    %336 = vmatpush1.msra.mxu0 %v291
    %337 = vmatprep.subr.mxu0 0.0
    %338 = vmatpush1.msra.mxu0 %v290
    %339 = vmatprep.subr.mxu0 0.0
    %340 = vmatpush1.msra.mxu0 %v289
    %341 = vmatprep.subr.mxu0 0.0
    %342 = vmatpush1.msra.mxu0 %v288
    %343 = vmatprep.subr.mxu0 0.0
    %344 = vmatpush2.msra.mxu0 0.0
    %345 = vmatprep.subr.mxu0 0.0
    %346 = vmatpush2.msra.mxu0 0.0
    %347 = vmatprep.subr.mxu0 0.0
    %348 = vmatpush2.msra.mxu0 0.0
    %349 = vmatprep.subr.mxu0 0.0
    %350 = vmatpush2.msra.mxu0 0.0
    %351 = vmatprep.subr.mxu0 0.0
    %352 = vmatpush2.msra.mxu0 0.0
    %353 = vmatprep.subr.mxu0 0.0
    %354 = vmatpush2.msra.mxu0 0.0
    %355 = vmatprep.subr.mxu0 0.0
    %356 = vmatpush2.msra.mxu0 0.0
    %357 = vmatprep.subr.mxu0 0.0
    %358 = vmatpush2.msra.mxu0 0.0
    %359 = vmatprep.subr.mxu0 0.0
    %360 = vmatpush2.msra.mxu0 0.0
    %361 = vmatprep.subr.mxu0 0.0
    %362 = vmatpush2.msra.mxu0 0.0
    %363 = vmatprep.subr.mxu0 0.0
    %364 = vmatpush2.msra.mxu0 0.0
    %365 = vmatprep.subr.mxu0 0.0
    %366 = vmatpush2.msra.mxu0 0.0
    %367 = vmatprep.subr.mxu0 0.0
    %368 = vmatpush2.msra.mxu0 0.0
    %369 = vmatprep.subr.mxu0 0.0
    %370 = vmatpush2.msra.mxu0 0.0
    %371 = vmatprep.subr.mxu0 0.0
    %372 = vmatpush2.msra.mxu0 0.0
    %373 = vmatprep.subr.mxu0 0.0
    %374 = vmatpush2.msra.mxu0 0.0
    %375 = vmatprep.mubr.f32.mxu0 0.0
    %376 = vmatmul.mubr.f32.gmra.mxu0 %v287
    %v377 = vpop.f32.mrf.mxu0
    %v378 = vadd.f32 %v309, %v377
    %v379 = vpop.f32.mrf.mxu0
    %380 = vdwg.mxu0
    %v381 = vmax.f32 %v378, 0.0
    %v382 = vld [vmem:[#allocation10] sm:$0xff]
    %v383 = vld [vmem:[#allocation10 + $0x8] sm:$0xff]
    %v384 = vld [vmem:[#allocation10 + $0x10] sm:$0xff]
    %v385 = vld [vmem:[#allocation10 + $0x18] sm:$0xff]
    %v386 = vld [vmem:[#allocation10 + $0x20] sm:$0xff]
    %v387 = vld [vmem:[#allocation10 + $0x28] sm:$0xff]
    %v388 = vld [vmem:[#allocation10 + $0x30] sm:$0xff]
    %v389 = vld [vmem:[#allocation10 + $0x38] sm:$0xff]
    %v390 = vld [vmem:[#allocation10 + $0x40] sm:$0xff]
    %v391 = vld [vmem:[#allocation10 + $0x48] sm:$0xff]
    %v392 = vld [vmem:[#allocation10 + $0x50] sm:$0xff]
    %v393 = vld [vmem:[#allocation10 + $0x58] sm:$0xff]
    %v394 = vld [vmem:[#allocation10 + $0x60] sm:$0xff]
    %v395 = vld [vmem:[#allocation10 + $0x68] sm:$0xff]
    %v396 = vld [vmem:[#allocation10 + $0x70] sm:$0xff]
    %v397 = vld [vmem:[#allocation10 + $0x78] sm:$0xff]
    %v398 = vld [vmem:[%s8] sm:$0x1]
    %v400 = vlaneseq
    %v401 = vshrl.u32 %v400, 7
    %v402 = vsub.s32 0, %v401
    %v403 = vrot.slane %v398, %v402
    %405 = vmatprep.subr.mxu0 0.0
    %406 = vmatpush1.msra.mxu0 %v397
    %407 = vmatprep.subr.mxu0 0.0
    %408 = vmatpush1.msra.mxu0 %v396
    %409 = vmatprep.subr.mxu0 0.0
    %410 = vmatpush1.msra.mxu0 %v395
    %411 = vmatprep.subr.mxu0 0.0
    %412 = vmatpush1.msra.mxu0 %v394
    %413 = vmatprep.subr.mxu0 0.0
    %414 = vmatpush1.msra.mxu0 %v393
    %415 = vmatprep.subr.mxu0 0.0
    %416 = vmatpush1.msra.mxu0 %v392
    %417 = vmatprep.subr.mxu0 0.0
    %418 = vmatpush1.msra.mxu0 %v391
    %419 = vmatprep.subr.mxu0 0.0
    %420 = vmatpush1.msra.mxu0 %v390
    %421 = vmatprep.subr.mxu0 0.0
    %422 = vmatpush1.msra.mxu0 %v389
    %423 = vmatprep.subr.mxu0 0.0
    %424 = vmatpush1.msra.mxu0 %v388
    %425 = vmatprep.subr.mxu0 0.0
    %426 = vmatpush1.msra.mxu0 %v387
    %427 = vmatprep.subr.mxu0 0.0
    %428 = vmatpush1.msra.mxu0 %v386
    %429 = vmatprep.subr.mxu0 0.0
    %430 = vmatpush1.msra.mxu0 %v385
    %431 = vmatprep.subr.mxu0 0.0
    %432 = vmatpush1.msra.mxu0 %v384
    %433 = vmatprep.subr.mxu0 0.0
    %434 = vmatpush1.msra.mxu0 %v383
    %435 = vmatprep.subr.mxu0 0.0
    %436 = vmatpush1.msra.mxu0 %v382
    %437 = vmatprep.subr.mxu0 0.0
    %438 = vmatpush2.msra.mxu0 0.0
    %439 = vmatprep.subr.mxu0 0.0
    %440 = vmatpush2.msra.mxu0 0.0
    %441 = vmatprep.subr.mxu0 0.0
    %442 = vmatpush2.msra.mxu0 0.0
    %443 = vmatprep.subr.mxu0 0.0
    %444 = vmatpush2.msra.mxu0 0.0
    %445 = vmatprep.subr.mxu0 0.0
    %446 = vmatpush2.msra.mxu0 0.0
    %447 = vmatprep.subr.mxu0 0.0
    %448 = vmatpush2.msra.mxu0 0.0
    %449 = vmatprep.subr.mxu0 0.0
    %450 = vmatpush2.msra.mxu0 0.0
    %451 = vmatprep.subr.mxu0 0.0
    %452 = vmatpush2.msra.mxu0 0.0
    %453 = vmatprep.subr.mxu0 0.0
    %454 = vmatpush2.msra.mxu0 0.0
    %455 = vmatprep.subr.mxu0 0.0
    %456 = vmatpush2.msra.mxu0 0.0
    %457 = vmatprep.subr.mxu0 0.0
    %458 = vmatpush2.msra.mxu0 0.0
    %459 = vmatprep.subr.mxu0 0.0
    %460 = vmatpush2.msra.mxu0 0.0
    %461 = vmatprep.subr.mxu0 0.0
    %462 = vmatpush2.msra.mxu0 0.0
    %463 = vmatprep.subr.mxu0 0.0
    %464 = vmatpush2.msra.mxu0 0.0
    %465 = vmatprep.subr.mxu0 0.0
    %466 = vmatpush2.msra.mxu0 0.0
    %467 = vmatprep.subr.mxu0 0.0
    %468 = vmatpush2.msra.mxu0 0.0
    %469 = vmatprep.mubr.f32.mxu0 0.0
    %470 = vmatmul.mubr.f32.gmra.mxu0 %v381
    %v471 = vpop.f32.mrf.mxu0
    %v472 = vadd.f32 %v403, %v471
    %v473 = vpop.f32.mrf.mxu0
    %474 = vdwg.mxu0
    %475 = vst [vmem:[#allocation11] sm:$0xff] %v472
    // Predicated region
    $region58: #{tpu_custom_call.1} parent=1 // pred_check
      _
    $region59: #{tpu_custom_call.1} parent=1 // pred_check_branch
      %477 = sbr.rel (0) target = $region61
    $region60: #{tpu_custom_call.1} parent=1 // pred_region
      %s479 = ssub.s32 128, 128
      %480 = vsyncadd [#allocation4], %s479
      %s482 = sshll.u32 [#allocation11], 4
      %s483 = int_to_ptr.vmem [resolvable:$true] %s482
      %485 = dma.vmem_to_hbm [thread:$0]  %s483, 128, %s9, [#allocation4]
    $region61: #{tpu_custom_call.1} parent=1 // pred_fallthru
      _
    // Predicated region
    $region62: #{tpu_custom_call.1} parent=1 // pred_check
      _
    $region63: #{tpu_custom_call.1} parent=1 // pred_check_branch
      %487 = sbr.rel (0) target = $region65
    $region64: #{tpu_custom_call.1} parent=1 // pred_region
      %488 = dma.done [#allocation4], 128
    $region65: #{tpu_custom_call.1} parent=1 // pred_fallthru
      _
    %489 = vsyncpa [#allocation3], 1
    %490 = vsyncpa [#allocation6], 1
    %491 = vsyncpa [#allocation9], 1
    %492 = vsyncpa [#allocation4], 1

</llo_original>
